<compile_context>
chip_gen: v7x
topology: tpu7x:2x2x1
jax: 0.10.0
libtpu: 0.0.40
codegen_flags: <defaults>
</compile_context>

<pallas_src>
import functools
import math

import jax
import jax.numpy as jnp
from jax.experimental import pallas as pl
from jax.experimental.pallas import tpu as pltpu


def _round_up(x, m):
    return ((x + m - 1) // m) * m


# ----------------------------- pass 1: beta ---------------------------------
def _score_kernel(z_ref, w1_ref, b1_ref, w2_ref, beta_ref, acc_ref,
                  *, n_true, num_meta, d, tile_n, needs_mask):
    i = pl.program_id(0)

    @pl.when(i == 0)
    def _init():
        acc_ref[...] = jnp.zeros_like(acc_ref)

    w1 = w1_ref[...].astype(jnp.float32)          # (D, H)
    b1 = b1_ref[...].astype(jnp.float32)          # (1, H)
    w2 = w2_ref[...].astype(jnp.float32)          # (1, H)

    if needs_mask:
        row = i * tile_n + jax.lax.broadcasted_iota(jnp.int32, (tile_n, 1), 0)
        valid = (row < n_true).astype(jnp.float32)    # (TN, 1)

    parts = []
    for mi in range(num_meta):                        # M is small & static
        zm = z_ref[:, pl.ds(mi * d, d)].astype(jnp.float32)             # (TN, D)
        h = jnp.tanh(jnp.dot(zm, w1, preferred_element_type=jnp.float32) + b1)
        if needs_mask:
            h = h * valid                                               # zero pad rows
        hsum = jnp.sum(h, axis=0, keepdims=True)                        # (1, H)
        parts.append(jnp.sum(hsum * w2, axis=-1, keepdims=True))        # (1, 1)
    acc_ref[...] += jnp.concatenate(parts, axis=-1)                     # (1, M)

    @pl.when(i == pl.num_programs(0) - 1)
    def _finalize():
        w = acc_ref[...] * (1.0 / n_true)             # mean over the true N
        w = w - jnp.max(w, axis=-1, keepdims=True)
        e = jnp.exp(w)
        beta_ref[...] = (e / jnp.sum(e, axis=-1, keepdims=True)).astype(beta_ref.dtype)


# ----------------------------- pass 2: apply ---------------------------------
def _apply_kernel(beta_ref, z_ref, o_ref, *, num_meta, d):
    # beta_ref lives in SMEM -> scalar reads; z slices are lane-aligned views.
    acc = beta_ref[0] * z_ref[:, pl.ds(0, d)].astype(jnp.float32)
    for mi in range(1, num_meta):
        acc = acc + beta_ref[mi] * z_ref[:, pl.ds(mi * d, d)].astype(jnp.float32)
    o_ref[...] = acc.astype(o_ref.dtype)


# ------------------------------- wrapper -------------------------------------
def semantic_attention(z, w1, b1, w2, *, tile_n=None):
    """z: (N, M, D); w1: (D, H); b1: (H,); w2: (H,). Returns (N, D)."""
    N, M, D = z.shape
    H = w1.shape[1]
    itemsize = jnp.dtype(z.dtype).itemsize

    # Pick the node-tile: ~2 MiB of z per tile (double-buffered by the
    # pipeline), multiple of 8 sublanes, capped for v7x's smaller VMEM.
    if tile_n is None:
        tn = max(1, (2 * 1024 * 1024) // max(1, M * D * itemsize))
        tn = min(tn, 2048)
    else:
        tn = tile_n
    tn = min(tn, _round_up(N, 8))
    tn = max(8, (tn // 8) * 8)

    n_pad = _round_up(N, tn)
    grid = (n_pad // tn,)
    needs_mask = n_pad != N

    z2 = z.reshape(N, M * D)                          # free, row-major view
    if needs_mask:
        z2 = jnp.pad(z2, ((0, n_pad - N), (0, 0)))    # zero rows, masked in pass 1
    b1_2d = b1.reshape(1, H)
    w2_2d = w2.reshape(1, H)

    # VMEM budget: double-buffered z + out tiles + params (+ slack), v7x-safe cap.
    z_tile_b = tn * M * D * itemsize
    o_tile_b = tn * D * itemsize
    param_b = (D * H + 2 * H) * 4
    need = 2 * (z_tile_b + o_tile_b) + 2 * param_b + (2 << 20)
    vmem_limit = int(min(max(2 * need, 16 * 2**20), 48 * 2**20))

    # --- pass 1: per-metapath mean scores -> softmax -> beta (1, M) ---
    score_cost = pl.CostEstimate(
        flops=2 * N * M * D * H + 4 * N * M * H,
        transcendentals=N * M * H + 2 * M,
        bytes_accessed=n_pad * M * D * itemsize + param_b + 4 * M)
    beta = pl.pallas_call(
        functools.partial(_score_kernel, n_true=N, num_meta=M, d=D,
                          tile_n=tn, needs_mask=needs_mask),
        out_shape=jax.ShapeDtypeStruct((1, M), jnp.float32),
        grid=grid,
        in_specs=[
            pl.BlockSpec((tn, M * D), lambda i: (i, 0)),
            pl.BlockSpec((D, H), lambda i: (0, 0)),
            pl.BlockSpec((1, H), lambda i: (0, 0)),
            pl.BlockSpec((1, H), lambda i: (0, 0)),
        ],
        out_specs=pl.BlockSpec((1, M), lambda i: (0, 0)),
        scratch_shapes=[pltpu.VMEM((1, M), jnp.float32)],
        compiler_params=pltpu.CompilerParams(
            dimension_semantics=("arbitrary",),
            vmem_limit_bytes=vmem_limit),
        cost_estimate=score_cost,
    )(z2, w1, b1_2d, w2_2d)

    # --- pass 2: out[n, :] = sum_m beta[m] * z[n, m, :] ---
    apply_cost = pl.CostEstimate(
        flops=2 * N * M * D,
        transcendentals=0,
        bytes_accessed=n_pad * M * D * itemsize + n_pad * D * itemsize + 4 * M)
    out = pl.pallas_call(
        functools.partial(_apply_kernel, num_meta=M, d=D),
        out_shape=jax.ShapeDtypeStruct((n_pad, D), z.dtype),
        grid=grid,
        in_specs=[
            pl.BlockSpec(memory_space=pltpu.MemorySpace.SMEM),   # beta scalars
            pl.BlockSpec((tn, M * D), lambda i: (i, 0)),
        ],
        out_specs=pl.BlockSpec((tn, D), lambda i: (i, 0)),
        compiler_params=pltpu.CompilerParams(
            dimension_semantics=("parallel",),
            vmem_limit_bytes=vmem_limit),
        cost_estimate=apply_cost,
    )(beta.reshape(M), z2)

    return out[:N] if needs_mask else out


# ------------------------------- reference -----------------------------------
def _reference(z, w1, b1, w2):
    s = jnp.tanh(z @ w1 + b1) @ w2                 # (N, M) == project(z).squeeze(-1)
    w = s.mean(axis=0)                             # (M,)
    beta = jax.nn.softmax(w, axis=0)               # (M,)
    return (beta[None, :, None] * z).sum(axis=1)   # (N, D)


if __name__ == "__main__":
    # nodes, metapaths, in_size, hidden_size (module default hidden_size=128)
    N, M, D, H = 72, 4, 128, 128
    key = jax.random.PRNGKey(0)
    kz, kw1, kb1, kw2 = jax.random.split(key, 4)

    z = jax.random.normal(kz, (N, M, D), dtype=jnp.float32)

    # nn.Linear-style init: U(-1/sqrt(fan_in), +1/sqrt(fan_in))
    lim1 = 1.0 / math.sqrt(D)
    lim2 = 1.0 / math.sqrt(H)
    w1 = jax.random.uniform(kw1, (D, H), minval=-lim1, maxval=lim1, dtype=jnp.float32)
    b1 = jax.random.uniform(kb1, (H,), minval=-lim1, maxval=lim1, dtype=jnp.float32)
    w2 = jax.random.uniform(kw2, (H,), minval=-lim2, maxval=lim2, dtype=jnp.float32)

    # tile_n=16 -> 5 grid steps and a remainder tile (72 % 16 != 0), exercising
    # the cross-tile accumulator, pl.when finalize, and the padding mask.
    out = jax.block_until_ready(semantic_attention(z, w1, b1, w2, tile_n=16))
    expected = _reference(z, w1, b1, w2)

    assert out.shape == (N, D)
    err = float(jnp.max(jnp.abs(out - expected)))
    assert jnp.allclose(out, expected, atol=1e-4, rtol=1e-4), f"max abs err = {err}"
    print("KERNEL_OK")
</pallas_src>

<mosaic_0001>
module attributes {stable_mosaic.version = 11 : i64} {
  func.func @_score_kernel(%arg0: i32, %arg1: memref<16x512xf32, #tpu.memory_space<vmem>>, %arg2: memref<128x128xf32, #tpu.memory_space<vmem>>, %arg3: memref<1x128xf32, #tpu.memory_space<vmem>>, %arg4: memref<1x128xf32, #tpu.memory_space<vmem>>, %arg5: memref<1x4xf32, #tpu.memory_space<vmem>>, %arg6: memref<1x4xf32, #tpu.memory_space<vmem>>) attributes {dimension_semantics = [#tpu.dimension_semantics<arbitrary>], iteration_bounds = array<i64: 5>, scalar_prefetch = 0 : i64, scratch_operands = 1 : i64, tpu.core_type = #tpu.core_type<tc>, window_params = [{transform_indices = @transform_0, window_bounds = array<i64: 16, 512>}, {pipeline_mode = #tpu.pipeline_mode<synchronous>, transform_indices = @transform_1, window_bounds = array<i64: 128, 128>}, {pipeline_mode = #tpu.pipeline_mode<synchronous>, transform_indices = @transform_2, window_bounds = array<i64: 1, 128>}, {pipeline_mode = #tpu.pipeline_mode<synchronous>, transform_indices = @transform_3, window_bounds = array<i64: 1, 128>}, {pipeline_mode = #tpu.pipeline_mode<synchronous>, transform_indices = @transform_4, window_bounds = array<i64: 1, 4>}]} {
    %c0_i32 = arith.constant 0 : i32
    %0 = arith.cmpi eq, %arg0, %c0_i32 : i32
    %1 = arith.extui %0 : i1 to i32
    %c0_i32_0 = arith.constant 0 : i32
    %2 = arith.cmpi ne, %1, %c0_i32_0 : i32
    scf.if %2 {
      %cst_27 = arith.constant 0.000000e+00 : f32
      %69 = vector.broadcast %cst_27 : f32 to vector<1x4xf32>
      %c0_28 = arith.constant 0 : index
      %c0_29 = arith.constant 0 : index
      %70 = vector.load %arg6[%c0_28, %c0_29] : memref<1x4xf32, #tpu.memory_space<vmem>>, vector<1x4xf32>
      tpu.vector_store %arg6[%c0_28, %c0_29], %69 {strides = array<i32>} : memref<1x4xf32, #tpu.memory_space<vmem>>, vector<1x4xf32>,
    } else {
    }
    %c0 = arith.constant 0 : index
    %c0_1 = arith.constant 0 : index
    %3 = vector.load %arg2[%c0, %c0_1] : memref<128x128xf32, #tpu.memory_space<vmem>>, vector<128x128xf32>
    %c0_2 = arith.constant 0 : index
    %c0_3 = arith.constant 0 : index
    %4 = vector.load %arg3[%c0_2, %c0_3] : memref<1x128xf32, #tpu.memory_space<vmem>>, vector<1x128xf32>
    %c0_4 = arith.constant 0 : index
    %c0_5 = arith.constant 0 : index
    %5 = vector.load %arg4[%c0_4, %c0_5] : memref<1x128xf32, #tpu.memory_space<vmem>>, vector<1x128xf32>
    %c16_i32 = arith.constant 16 : i32
    %6 = arith.muli %arg0, %c16_i32 : i32
    %7 = tpu.iota {dimensions = array<i32: 0>} : vector<16x1xi32>
    %8 = vector.broadcast %6 : i32 to vector<16x1xi32>
    %9 = arith.addi %8, %7 : vector<16x1xi32>
    %c72_i32 = arith.constant 72 : i32
    %10 = vector.broadcast %c72_i32 : i32 to vector<16x1xi32>
    %11 = arith.cmpi slt, %9, %10 : vector<16x1xi32>
    %12 = arith.extui %11 : vector<16x1xi1> to vector<16x1xi32>
    %13 = arith.sitofp %12 : vector<16x1xi32> to vector<16x1xf32>
    %c0_6 = arith.constant 0 : index
    %c0_7 = arith.constant 0 : index
    %14 = vector.load %arg1[%c0_6, %c0_7] : memref<16x512xf32, #tpu.memory_space<vmem>>, vector<16x128xf32>
    %cst = arith.constant dense<0.000000e+00> : vector<16x128xf32>
    %15 = tpu.matmul %14, %3, %cst {dimension_numbers = #tpu.dot_dimension_numbers<[1], [0], [0], [1], [0, 0, 1, 1], [], []>} : vector<16x128xf32>, vector<128x128xf32>, vector<16x128xf32> -> vector<16x128xf32>
    %16 = vector.broadcast %4 : vector<1x128xf32> to vector<16x128xf32>
    %17 = arith.addf %15, %16 : vector<16x128xf32>
    %18 = math.tanh %17 : vector<16x128xf32>
    %19 = vector.broadcast %13 : vector<16x1xf32> to vector<16x128xf32>
    %20 = arith.mulf %18, %19 : vector<16x128xf32>
    %cst_8 = arith.constant dense<0.000000e+00> : vector<128xf32>
    %21 = vector.multi_reduction <add>, %20, %cst_8 [0] : vector<16x128xf32> to vector<128xf32>
    %22 = vector.shape_cast %21 : vector<128xf32> to vector<1x128xf32>
    %23 = arith.mulf %22, %5 : vector<1x128xf32>
    %cst_9 = arith.constant dense<0.000000e+00> : vector<1xf32>
    %24 = vector.multi_reduction <add>, %23, %cst_9 [1] : vector<1x128xf32> to vector<1xf32>
    %25 = vector.shape_cast %24 : vector<1xf32> to vector<1x1xf32>
    %c0_10 = arith.constant 0 : index
    %c128 = arith.constant 128 : index
    %26 = vector.load %arg1[%c0_10, %c128] : memref<16x512xf32, #tpu.memory_space<vmem>>, vector<16x128xf32>
    %cst_11 = arith.constant dense<0.000000e+00> : vector<16x128xf32>
    %27 = tpu.matmul %26, %3, %cst_11 {dimension_numbers = #tpu.dot_dimension_numbers<[1], [0], [0], [1], [0, 0, 1, 1], [], []>} : vector<16x128xf32>, vector<128x128xf32>, vector<16x128xf32> -> vector<16x128xf32>
    %28 = vector.broadcast %4 : vector<1x128xf32> to vector<16x128xf32>
    %29 = arith.addf %27, %28 : vector<16x128xf32>
    %30 = math.tanh %29 : vector<16x128xf32>
    %31 = vector.broadcast %13 : vector<16x1xf32> to vector<16x128xf32>
    %32 = arith.mulf %30, %31 : vector<16x128xf32>
    %cst_12 = arith.constant dense<0.000000e+00> : vector<128xf32>
    %33 = vector.multi_reduction <add>, %32, %cst_12 [0] : vector<16x128xf32> to vector<128xf32>
    %34 = vector.shape_cast %33 : vector<128xf32> to vector<1x128xf32>
    %35 = arith.mulf %34, %5 : vector<1x128xf32>
    %cst_13 = arith.constant dense<0.000000e+00> : vector<1xf32>
    %36 = vector.multi_reduction <add>, %35, %cst_13 [1] : vector<1x128xf32> to vector<1xf32>
    %37 = vector.shape_cast %36 : vector<1xf32> to vector<1x1xf32>
    %c0_14 = arith.constant 0 : index
    %c256 = arith.constant 256 : index
    %38 = vector.load %arg1[%c0_14, %c256] : memref<16x512xf32, #tpu.memory_space<vmem>>, vector<16x128xf32>
    %cst_15 = arith.constant dense<0.000000e+00> : vector<16x128xf32>
    %39 = tpu.matmul %38, %3, %cst_15 {dimension_numbers = #tpu.dot_dimension_numbers<[1], [0], [0], [1], [0, 0, 1, 1], [], []>} : vector<16x128xf32>, vector<128x128xf32>, vector<16x128xf32> -> vector<16x128xf32>
    %40 = vector.broadcast %4 : vector<1x128xf32> to vector<16x128xf32>
    %41 = arith.addf %39, %40 : vector<16x128xf32>
    %42 = math.tanh %41 : vector<16x128xf32>
    %43 = vector.broadcast %13 : vector<16x1xf32> to vector<16x128xf32>
    %44 = arith.mulf %42, %43 : vector<16x128xf32>
    %cst_16 = arith.constant dense<0.000000e+00> : vector<128xf32>
    %45 = vector.multi_reduction <add>, %44, %cst_16 [0] : vector<16x128xf32> to vector<128xf32>
    %46 = vector.shape_cast %45 : vector<128xf32> to vector<1x128xf32>
    %47 = arith.mulf %46, %5 : vector<1x128xf32>
    %cst_17 = arith.constant dense<0.000000e+00> : vector<1xf32>
    %48 = vector.multi_reduction <add>, %47, %cst_17 [1] : vector<1x128xf32> to vector<1xf32>
    %49 = vector.shape_cast %48 : vector<1xf32> to vector<1x1xf32>
    %c0_18 = arith.constant 0 : index
    %c384 = arith.constant 384 : index
    %50 = vector.load %arg1[%c0_18, %c384] : memref<16x512xf32, #tpu.memory_space<vmem>>, vector<16x128xf32>
    %cst_19 = arith.constant dense<0.000000e+00> : vector<16x128xf32>
    %51 = tpu.matmul %50, %3, %cst_19 {dimension_numbers = #tpu.dot_dimension_numbers<[1], [0], [0], [1], [0, 0, 1, 1], [], []>} : vector<16x128xf32>, vector<128x128xf32>, vector<16x128xf32> -> vector<16x128xf32>
    %52 = vector.broadcast %4 : vector<1x128xf32> to vector<16x128xf32>
    %53 = arith.addf %51, %52 : vector<16x128xf32>
    %54 = math.tanh %53 : vector<16x128xf32>
    %55 = vector.broadcast %13 : vector<16x1xf32> to vector<16x128xf32>
    %56 = arith.mulf %54, %55 : vector<16x128xf32>
    %cst_20 = arith.constant dense<0.000000e+00> : vector<128xf32>
    %57 = vector.multi_reduction <add>, %56, %cst_20 [0] : vector<16x128xf32> to vector<128xf32>
    %58 = vector.shape_cast %57 : vector<128xf32> to vector<1x128xf32>
    %59 = arith.mulf %58, %5 : vector<1x128xf32>
    %cst_21 = arith.constant dense<0.000000e+00> : vector<1xf32>
    %60 = vector.multi_reduction <add>, %59, %cst_21 [1] : vector<1x128xf32> to vector<1xf32>
    %61 = vector.shape_cast %60 : vector<1xf32> to vector<1x1xf32>
    %c0_22 = arith.constant 0 : index
    %c0_23 = arith.constant 0 : index
    %62 = vector.load %arg6[%c0_22, %c0_23] : memref<1x4xf32, #tpu.memory_space<vmem>>, vector<1x4xf32>
    %63 = tpu.concatenate %25, %37, %49, %61 in 1 : vector<1x1xf32>, vector<1x1xf32>, vector<1x1xf32>, vector<1x1xf32> -> vector<1x4xf32>
    %64 = arith.addf %62, %63 : vector<1x4xf32>
    %c0_24 = arith.constant 0 : index
    %c0_25 = arith.constant 0 : index
    %65 = vector.load %arg6[%c0_24, %c0_25] : memref<1x4xf32, #tpu.memory_space<vmem>>, vector<1x4xf32>
    tpu.vector_store %arg6[%c0_24, %c0_25], %64 {strides = array<i32>} : memref<1x4xf32, #tpu.memory_space<vmem>>, vector<1x4xf32>,
    %c4_i32 = arith.constant 4 : i32
    %66 = arith.cmpi eq, %arg0, %c4_i32 : i32
    %67 = arith.extui %66 : i1 to i32
    %c0_i32_26 = arith.constant 0 : i32
    %68 = arith.cmpi ne, %67, %c0_i32_26 : i32
    scf.if %68 {
      %c0_27 = arith.constant 0 : index
      %c0_28 = arith.constant 0 : index
      %69 = vector.load %arg6[%c0_27, %c0_28] : memref<1x4xf32, #tpu.memory_space<vmem>>, vector<1x4xf32>
      %cst_29 = arith.constant 0.013888889 : f32
      %70 = vector.broadcast %cst_29 : f32 to vector<1x4xf32>
      %71 = arith.mulf %69, %70 : vector<1x4xf32>
      %cst_30 = arith.constant dense<0xFF800000> : vector<1xf32>
      %72 = vector.multi_reduction <maximumf>, %71, %cst_30 [1] : vector<1x4xf32> to vector<1xf32>
      %73 = vector.shape_cast %72 : vector<1xf32> to vector<1x1xf32>
      %74 = vector.broadcast %73 : vector<1x1xf32> to vector<1x4xf32>
      %75 = arith.subf %71, %74 : vector<1x4xf32>
      %76 = math.exp %75 : vector<1x4xf32>
      %cst_31 = arith.constant dense<0.000000e+00> : vector<1xf32>
      %77 = vector.multi_reduction <add>, %76, %cst_31 [1] : vector<1x4xf32> to vector<1xf32>
      %78 = vector.shape_cast %77 : vector<1xf32> to vector<1x1xf32>
      %79 = vector.broadcast %78 : vector<1x1xf32> to vector<1x4xf32>
      %80 = arith.divf %76, %79 : vector<1x4xf32>
      %c0_32 = arith.constant 0 : index
      %c0_33 = arith.constant 0 : index
      %81 = vector.load %arg5[%c0_32, %c0_33] : memref<1x4xf32, #tpu.memory_space<vmem>>, vector<1x4xf32>
      tpu.vector_store %arg5[%c0_32, %c0_33], %80 {strides = array<i32>} : memref<1x4xf32, #tpu.memory_space<vmem>>, vector<1x4xf32>,
    } else {
    }
    return
  }
  func.func @transform_0(%arg0: i32) -> (i32, i32) {
    %c0_i32 = arith.constant 0 : i32
    %c0_i32_0 = arith.constant 0 : i32
    return %arg0, %c0_i32 : i32, i32
  }
  func.func @transform_1(%arg0: i32) -> (i32, i32) {
    %c0_i32 = arith.constant 0 : i32
    %c0_i32_0 = arith.constant 0 : i32
    %c0_i32_1 = arith.constant 0 : i32
    return %c0_i32, %c0_i32_0 : i32, i32
  }
  func.func @transform_2(%arg0: i32) -> (i32, i32) {
    %c0_i32 = arith.constant 0 : i32
    %c0_i32_0 = arith.constant 0 : i32
    %c0_i32_1 = arith.constant 0 : i32
    return %c0_i32, %c0_i32_0 : i32, i32
  }
  func.func @transform_3(%arg0: i32) -> (i32, i32) {
    %c0_i32 = arith.constant 0 : i32
    %c0_i32_0 = arith.constant 0 : i32
    %c0_i32_1 = arith.constant 0 : i32
    return %c0_i32, %c0_i32_0 : i32, i32
  }
  func.func @transform_4(%arg0: i32) -> (i32, i32) {
    %c0_i32 = arith.constant 0 : i32
    %c0_i32_0 = arith.constant 0 : i32
    %c0_i32_1 = arith.constant 0 : i32
    return %c0_i32, %c0_i32_0 : i32, i32
  }
}

</mosaic_0001>

<llo_original>
// kernel: tpu_custom_call.1
$region0: #{tpu_custom_call.1}
  #allocation0 [shape = 'u32[]', space=smem, size = 0x4, offset = 0x4, fixed_abs, tag = 'smem constant byte address 0x4 - core index']
  #allocation1 [shape = 'u32[144,128]{1,0:T(1,128)}', space=vmem, size = 0x12000, scoped, tag = 'internal scratch']
  #allocation2 [shape = 'f32[1,4]{1,0:T(1,128)}', space=vmem, size = 0x200, scoped, tag = 'scratch operand']
  %s0 = inlined_call_operand.hbm [shape: f32[80,512], index: 0, kind: input, shape index: {}]
  %s1 = inlined_call_operand.hbm [shape: f32[128,128], index: 1, kind: input, shape index: {}]
  %s2 = inlined_call_operand.vmem [shape: f32[1,128], index: 2, kind: input, shape index: {}]
  %s3 = inlined_call_operand.vmem [shape: f32[1,128], index: 3, kind: input, shape index: {}]
  %s4 = inlined_call_operand.hbm [shape: f32[1,4], index: 4, kind: output, shape index: {}]
  %s5 = sld [smem:[#allocation0]]
  $region65: #{tpu_custom_call.1} parent=0
    _
  %s7 = ssub.s32 1, %s5
  %s8 = scalar_select 0, %s7, %s5
  $region1: #{tpu_custom_call.1} parent=0
    #allocation3 [shape = 'u8[65536]{0}', space=vmem, size = 0x10000, scoped, tag = 'input window, operand 0']
    #allocation4 [shape = 's32[2]{0}', space=sflag, size = 0x8, scoped, tag = 'scoped memory for tpu_custom_call.1']
    #allocation5 [shape = 's32[2]{0}', space=sflag, size = 0x8, scoped, tag = 'scoped memory for tpu_custom_call.1']
    #allocation6 [shape = 'u8[65536]{0}', space=vmem, size = 0x10000, scoped, tag = 'input window, operand 1, single buffered']
    #allocation7 [shape = 's32[1]{0}', space=sflag, size = 0x4, scoped, tag = 'scoped memory for tpu_custom_call.1']
    #allocation8 [shape = 'u8[512]{0}', space=vmem, size = 0x400, scoped, tag = 'output window, operand 0, single buffered']
    %9 = vsyncpa [#allocation4], 0
    %s10 = scalar_lea.sflag [#allocation4], 1
    %11 = vsyncpa %s10, 0
    %12 = vsyncpa [#allocation7], 0
    %13 = vsyncpa [#allocation5], 0
    loop: start=0, step=1, limit=7
    $region2: #{tpu_custom_call.1} parent=1 // loop_pre_header
      _
    $region3: #{tpu_custom_call.1} parent=1 // loop_header
      %s15 = sphi 0, %s19
      %p16 = scmp.ge.s32.totalorder %s15, 7
      %s25 = sphi 0, %s27
      %s28 = sphi 0, %s25
      %s29 = sphi 0, %s28
      %s45 = sphi 0, %s29
      %s49 = sphi 0, %s49
      %s51 = sphi 0, %s49
      %s52 = sphi 0, %s51
      %s66 = sphi 0, %s52
      %s70 = sphi 0, %s70
      %s72 = sphi 0, %s70
      %s73 = sphi 0, %s72
      %s87 = sphi 0, %s73
      %s91 = sphi 0, %s91
      %s93 = sphi 0, %s91
      %s94 = sphi 0, %s93
      %s108 = sphi 0, %s94
      %s112 = sphi 0, %s112
      %s114 = sphi 0, %s112
      %s115 = sphi 0, %s114
      %s129 = sphi 0, %s115
    $region4: #{tpu_custom_call.1} parent=1 // loop_header_branch
      %18 = sbr.rel (%p16) target = $region8
    $region5: #{tpu_custom_call.1} parent=1 // loop_body
      %s20 = ssub.s32 %s15, 1
      %s21 = ssub.s32 %s15, 2
      %s22 = sadd.s32 %s15, 1
      %s23 = ssub.s32 %s15, %s22
      %p24 = scmp.eq.s32.totalorder %s23, 0
      %s26 = sadd.s32 %s25, 1
      %s27 = scalar_select %p24, %s25, %s26
      %p30 = pneg %p24
      %p31 = scmp.eq.s32.totalorder %s15, 4
      %p32 = por %p30, %p31
      %p33 = scmp.ne.s32.totalorder %s25, %s28
      %p34 = scmp.eq.s32.totalorder %s15, 0
      %p35 = por %p33, %p34
      %p36 = scmp.ne.s32.totalorder %s25, %s28
      %p37 = scmp.eq.s32.totalorder %s20, 4
      %p38 = por %p36, %p37
      %p39 = scmp.ne.s32.totalorder %s28, %s29
      %p40 = scmp.eq.s32.totalorder %s20, 0
      %p41 = por %p39, %p40
      %p42 = scmp.ne.s32.totalorder %s28, %s29
      %p43 = scmp.eq.s32.totalorder %s21, 4
      %p44 = por %p42, %p43
      %p46 = scmp.ne.s32.totalorder %s29, %s45
      %p47 = scmp.eq.s32.totalorder %s21, 0
      %p48 = por %p46, %p47
      %s50 = sadd.s32 %s49, 1
      %p53 = scmp.eq.s32.totalorder %s15, 4
      %p54 = scmp.ne.s32.totalorder %s49, %s51
      %p55 = scmp.eq.s32.totalorder %s15, 0
      %p56 = por %p54, %p55
      %p57 = scmp.ne.s32.totalorder %s49, %s51
      %p58 = scmp.eq.s32.totalorder %s20, 4
      %p59 = por %p57, %p58
      %p60 = scmp.ne.s32.totalorder %s51, %s52
      %p61 = scmp.eq.s32.totalorder %s20, 0
      %p62 = por %p60, %p61
      %p63 = scmp.ne.s32.totalorder %s51, %s52
      %p64 = scmp.eq.s32.totalorder %s21, 4
      %p65 = por %p63, %p64
      %p67 = scmp.ne.s32.totalorder %s52, %s66
      %p68 = scmp.eq.s32.totalorder %s21, 0
      %p69 = por %p67, %p68
      %s71 = sadd.s32 %s70, 1
      %p74 = scmp.eq.s32.totalorder %s15, 4
      %p75 = scmp.ne.s32.totalorder %s70, %s72
      %p76 = scmp.eq.s32.totalorder %s15, 0
      %p77 = por %p75, %p76
      %p78 = scmp.ne.s32.totalorder %s70, %s72
      %p79 = scmp.eq.s32.totalorder %s20, 4
      %p80 = por %p78, %p79
      %p81 = scmp.ne.s32.totalorder %s72, %s73
      %p82 = scmp.eq.s32.totalorder %s20, 0
      %p83 = por %p81, %p82
      %p84 = scmp.ne.s32.totalorder %s72, %s73
      %p85 = scmp.eq.s32.totalorder %s21, 4
      %p86 = por %p84, %p85
      %p88 = scmp.ne.s32.totalorder %s73, %s87
      %p89 = scmp.eq.s32.totalorder %s21, 0
      %p90 = por %p88, %p89
      %s92 = sadd.s32 %s91, 1
      %p95 = scmp.eq.s32.totalorder %s15, 4
      %p96 = scmp.ne.s32.totalorder %s91, %s93
      %p97 = scmp.eq.s32.totalorder %s15, 0
      %p98 = por %p96, %p97
      %p99 = scmp.ne.s32.totalorder %s91, %s93
      %p100 = scmp.eq.s32.totalorder %s20, 4
      %p101 = por %p99, %p100
      %p102 = scmp.ne.s32.totalorder %s93, %s94
      %p103 = scmp.eq.s32.totalorder %s20, 0
      %p104 = por %p102, %p103
      %p105 = scmp.ne.s32.totalorder %s93, %s94
      %p106 = scmp.eq.s32.totalorder %s21, 4
      %p107 = por %p105, %p106
      %p109 = scmp.ne.s32.totalorder %s94, %s108
      %p110 = scmp.eq.s32.totalorder %s21, 0
      %p111 = por %p109, %p110
      %s113 = sadd.s32 %s112, 1
      %p116 = scmp.eq.s32.totalorder %s15, 4
      %p117 = scmp.ne.s32.totalorder %s112, %s114
      %p118 = scmp.eq.s32.totalorder %s15, 0
      %p119 = por %p117, %p118
      %p120 = scmp.ne.s32.totalorder %s112, %s114
      %p121 = scmp.eq.s32.totalorder %s20, 4
      %p122 = por %p120, %p121
      %p123 = scmp.ne.s32.totalorder %s114, %s115
      %p124 = scmp.eq.s32.totalorder %s20, 0
      %p125 = por %p123, %p124
      %p126 = scmp.ne.s32.totalorder %s114, %s115
      %p127 = scmp.eq.s32.totalorder %s21, 4
      %p128 = por %p126, %p127
      %p130 = scmp.ne.s32.totalorder %s115, %s129
      %p131 = scmp.eq.s32.totalorder %s21, 0
      %p132 = por %p130, %p131
      %p133 = scmp.le.s32.totalorder 1, %s15
      %p134 = scmp.lt.s32.totalorder %s15, 6
      %p135 = pnand %p133, %p134
      %p136 = pneg %p135
      // Predicated region
      $region9: #{tpu_custom_call.1} parent=5 // pred_check
        _
      $region10: #{tpu_custom_call.1} parent=5 // pred_check_branch
        %138 = sbr.rel (%p135) target = $region12
      $region11: #{tpu_custom_call.1} parent=5 // pred_region
        %s139 = ssub.s32 %s15, 1
        // Predicated region
        $region13: #{tpu_custom_call.1} parent=11 // pred_check
          %p140 = pneg %p62
        $region14: #{tpu_custom_call.1} parent=11 // pred_check_branch
          %142 = sbr.rel (%p140) target = $region16
        $region15: #{tpu_custom_call.1} parent=11 // pred_region
          %s144 = ssub.s32 2048, 2048
          %145 = vsyncadd [#allocation7], %s144
          %s146 = sshll.u32 [#allocation6], 4
          %s147 = int_to_ptr.vmem [resolvable:$true] %s146
          %152 = dma.hbm_to_vmem [thread:$0]  %s1, 2048, %s147, [#allocation7], 128, 128, 8
        $region16: #{tpu_custom_call.1} parent=11 // pred_fallthru
          _
        // Predicated region
        $region17: #{tpu_custom_call.1} parent=11 // pred_check
          %p153 = pneg %p83
        $region18: #{tpu_custom_call.1} parent=11 // pred_check_branch
          %155 = sbr.rel (%p153) target = $region20
        $region19: #{tpu_custom_call.1} parent=11 // pred_region
          _
        $region20: #{tpu_custom_call.1} parent=11 // pred_fallthru
          _
        // Predicated region
        $region21: #{tpu_custom_call.1} parent=11 // pred_check
          %p156 = pneg %p104
        $region22: #{tpu_custom_call.1} parent=11 // pred_check_branch
          %158 = sbr.rel (%p156) target = $region24
        $region23: #{tpu_custom_call.1} parent=11 // pred_region
          _
        $region24: #{tpu_custom_call.1} parent=11 // pred_fallthru
          _
      $region12: #{tpu_custom_call.1} parent=5 // pred_fallthru
        _
      %p159 = scmp.lt.s32.totalorder %s15, 5
      // Predicated region
      $region25: #{tpu_custom_call.1} parent=5 // pred_check
        %p160 = pneg %p159
      $region26: #{tpu_custom_call.1} parent=5 // pred_check_branch
        %162 = sbr.rel (%p160) target = $region28
      $region27: #{tpu_custom_call.1} parent=5 // pred_region
        // Predicated region
        $region29: #{tpu_custom_call.1} parent=27 // pred_check
          %p163 = pneg %p35
        $region30: #{tpu_custom_call.1} parent=27 // pred_check_branch
          %165 = sbr.rel (%p163) target = $region32
        $region31: #{tpu_custom_call.1} parent=27 // pred_region
          %s166 = sand.u32 %s25, 1
          %s167 = scalar_lea.sflag [#allocation4], %s166
          %s168 = sand.u32 %s25, 1
          %s169 = smul.addr %s168, 64
          %s170 = scalar_lea.vmem [#allocation3], %s169
          %s171 = smul.u32 2, %s15
          %s173 = ssub.s32 1024, 1024
          %174 = vsyncadd %s167, %s173
          %s175 = smul.addr %s171, 4
          %s176 = smul.addr %s175, 128
          %s177 = scalar_lea.hbm %s0, %s176
          %s178 = sshll.u32 %s170, 4
          %s179 = int_to_ptr.vmem [resolvable:$true] %s178
          %184 = dma.hbm_to_vmem [thread:$0]  %s177, 1024, %s179, %s167, 512, 512, 32
        $region32: #{tpu_custom_call.1} parent=27 // pred_fallthru
          _
      $region28: #{tpu_custom_call.1} parent=5 // pred_fallthru
        _
      %p185 = scmp.le.s32.totalorder 1, %s15
      %p186 = scmp.lt.s32.totalorder %s15, 6
      %p187 = pnand %p185, %p186
      %p188 = pneg %p187
      // Predicated region
      $region33: #{tpu_custom_call.1} parent=5 // pred_check
        _
      $region34: #{tpu_custom_call.1} parent=5 // pred_check_branch
        %190 = sbr.rel (%p187) target = $region36
      $region35: #{tpu_custom_call.1} parent=5 // pred_region
        %s191 = ssub.s32 %s15, 1
        %s192 = sand.u32 %s28, 1
        %s193 = scalar_lea.sflag [#allocation4], %s192
        %s194 = sand.u32 %s28, 1
        %s195 = smul.addr %s194, 64
        %s196 = scalar_lea.vmem [#allocation3], %s195
        // Predicated region
        $region37: #{tpu_custom_call.1} parent=35 // pred_check
          %p197 = pneg %p41
        $region38: #{tpu_custom_call.1} parent=35 // pred_check_branch
          %199 = sbr.rel (%p197) target = $region40
        $region39: #{tpu_custom_call.1} parent=35 // pred_region
          %200 = dma.done %s193, 1024
        $region40: #{tpu_custom_call.1} parent=35 // pred_fallthru
          _
        // Predicated region
        $region41: #{tpu_custom_call.1} parent=35 // pred_check
          %p201 = pneg %p62
        $region42: #{tpu_custom_call.1} parent=35 // pred_check_branch
          %203 = sbr.rel (%p201) target = $region44
        $region43: #{tpu_custom_call.1} parent=35 // pred_region
          %204 = dma.done [#allocation7], 2048
        $region44: #{tpu_custom_call.1} parent=35 // pred_fallthru
          _
        %s205 = sand.u32 %s28, 1
        %s206 = scalar_lea.sflag [#allocation4], %s205
        %s207 = sand.u32 %s28, 1
        %s208 = smul.addr %s207, 64
        %s209 = scalar_lea.vmem [#allocation3], %s208
        %p210 = pneg %p41
        %p211 = pneg %p38
        %p212 = pneg %p62
        %p213 = pneg %p59
        %p214 = pneg %p83
        %p215 = pneg %p80
        %p216 = pneg %p104
        %p217 = pneg %p101
        %p218 = pneg %p125
        %p219 = pneg %p122
        %s220 = smul.u32 2, %s20
        %p221 = scmp.eq.s32.totalorder %s20, 0
        // Predicated region
        $region45: #{tpu_custom_call.1} parent=35 // pred_check
          %p222 = pneg %p221
        $region46: #{tpu_custom_call.1} parent=35 // pred_check_branch
          %224 = sbr.rel (%p222) target = $region48
        $region47: #{tpu_custom_call.1} parent=35 // pred_region
          %vm225 = vcmask 24576
          %226 = vst.msk [vmem:[#allocation2] sm:$0x1] %vm225, 0.0
        $region48: #{tpu_custom_call.1} parent=35 // pred_fallthru
          _
        %v227 = vld [vmem:[#allocation6] sm:$0xff]
        %v228 = vld [vmem:[#allocation6 + $0x8] sm:$0xff]
        %v229 = vld [vmem:[#allocation6 + $0x10] sm:$0xff]
        %v230 = vld [vmem:[#allocation6 + $0x18] sm:$0xff]
        %v231 = vld [vmem:[#allocation6 + $0x20] sm:$0xff]
        %v232 = vld [vmem:[#allocation6 + $0x28] sm:$0xff]
        %v233 = vld [vmem:[#allocation6 + $0x30] sm:$0xff]
        %v234 = vld [vmem:[#allocation6 + $0x38] sm:$0xff]
        %v235 = vld [vmem:[#allocation6 + $0x40] sm:$0xff]
        %v236 = vld [vmem:[#allocation6 + $0x48] sm:$0xff]
        %v237 = vld [vmem:[#allocation6 + $0x50] sm:$0xff]
        %v238 = vld [vmem:[#allocation6 + $0x58] sm:$0xff]
        %v239 = vld [vmem:[#allocation6 + $0x60] sm:$0xff]
        %v240 = vld [vmem:[#allocation6 + $0x68] sm:$0xff]
        %v241 = vld [vmem:[#allocation6 + $0x70] sm:$0xff]
        %v242 = vld [vmem:[#allocation6 + $0x78] sm:$0xff]
        %v243 = vld [vmem:[%s2] sm:$0x1]
        %v244 = vld [vmem:[%s3] sm:$0x1]
        %s245 = smul.u32 %s20, 16
        %v246 = vlaneseq
        %v247 = vshrl.u32 %v246, 7
        %v248 = vadd.s32 %v247, 8
        %v249 = vstv %s245
        %v250 = vadd.s32 %v249, %v247
        %v251 = vadd.s32 %v249, %v248
        %vm252 = vcmp.lt.s32.totalorder %v250, 72
        %vm253 = vcmp.lt.s32.totalorder %v251, 72
        %v254 = vsel %vm252, 1, 0
        %v255 = vsel %vm253, 1, 0
        %v256 = vcvt.s32.f32 %v254
        %v257 = vcvt.s32.f32 %v255
        %v258 = vld [vmem:[%s196] sm:$0xff]
        %v259 = vld [vmem:[%s196 + $0x20] sm:$0xff]
        %v261 = vlaneseq
        %v262 = vshrl.u32 %v261, 7
        %v263 = vsub.s32 0, %v262
        %v264 = vrot.slane %v243, %v263
        %266 = vmatprep.subr.mxu0 0.0
        %267 = vmatpush1.msra.mxu0 %v227
        %268 = vmatprep.subr.mxu0 0.0
        %269 = vmatpush1.msra.mxu0 %v228
        %270 = vmatprep.subr.mxu0 0.0
        %271 = vmatpush1.msra.mxu0 %v229
        %272 = vmatprep.subr.mxu0 0.0
        %273 = vmatpush1.msra.mxu0 %v230
        %274 = vmatprep.subr.mxu0 0.0
        %275 = vmatpush1.msra.mxu0 %v231
        %276 = vmatprep.subr.mxu0 0.0
        %277 = vmatpush1.msra.mxu0 %v232
        %278 = vmatprep.subr.mxu0 0.0
        %279 = vmatpush1.msra.mxu0 %v233
        %280 = vmatprep.subr.mxu0 0.0
        %281 = vmatpush1.msra.mxu0 %v234
        %282 = vmatprep.subr.mxu0 0.0
        %283 = vmatpush1.msra.mxu0 %v235
        %284 = vmatprep.subr.mxu0 0.0
        %285 = vmatpush1.msra.mxu0 %v236
        %286 = vmatprep.subr.mxu0 0.0
        %287 = vmatpush1.msra.mxu0 %v237
        %288 = vmatprep.subr.mxu0 0.0
        %289 = vmatpush1.msra.mxu0 %v238
        %290 = vmatprep.subr.mxu0 0.0
        %291 = vmatpush1.msra.mxu0 %v239
        %292 = vmatprep.subr.mxu0 0.0
        %293 = vmatpush1.msra.mxu0 %v240
        %294 = vmatprep.subr.mxu0 0.0
        %295 = vmatpush1.msra.mxu0 %v241
        %296 = vmatprep.subr.mxu0 0.0
        %297 = vmatpush1.msra.mxu0 %v242
        %298 = vmatprep.subr.mxu0 0.0
        %299 = vmatpush1.msra.mxu0 0.0
        %300 = vmatprep.subr.mxu0 0.0
        %301 = vmatpush1.msra.mxu0 0.0
        %302 = vmatprep.subr.mxu0 0.0
        %303 = vmatpush1.msra.mxu0 0.0
        %304 = vmatprep.subr.mxu0 0.0
        %305 = vmatpush1.msra.mxu0 0.0
        %306 = vmatprep.subr.mxu0 0.0
        %307 = vmatpush1.msra.mxu0 0.0
        %308 = vmatprep.subr.mxu0 0.0
        %309 = vmatpush1.msra.mxu0 0.0
        %310 = vmatprep.subr.mxu0 0.0
        %311 = vmatpush1.msra.mxu0 0.0
        %312 = vmatprep.subr.mxu0 0.0
        %313 = vmatpush1.msra.mxu0 0.0
        %314 = vmatprep.subr.mxu0 0.0
        %315 = vmatpush1.msra.mxu0 0.0
        %316 = vmatprep.subr.mxu0 0.0
        %317 = vmatpush1.msra.mxu0 0.0
        %318 = vmatprep.subr.mxu0 0.0
        %319 = vmatpush1.msra.mxu0 0.0
        %320 = vmatprep.subr.mxu0 0.0
        %321 = vmatpush1.msra.mxu0 0.0
        %322 = vmatprep.subr.mxu0 0.0
        %323 = vmatpush1.msra.mxu0 0.0
        %324 = vmatprep.subr.mxu0 0.0
        %325 = vmatpush1.msra.mxu0 0.0
        %326 = vmatprep.subr.mxu0 0.0
        %327 = vmatpush1.msra.mxu0 0.0
        %328 = vmatprep.subr.mxu0 0.0
        %329 = vmatpush1.msra.mxu0 0.0
        %330 = vmatprep.mubr.f32.mxu0 0.0
        %331 = vmatmul.mubr.f32.gmra.mrb[0].mxu0 %v258
        %v332 = vpop.f32.mrb[0].mxu0
        %v333 = vadd.f32 %v264, %v332
        %v334 = vpop.f32.mrb[0].mxu0
        %335 = vmatprep.mubr.f32.mxu0 0.0
        %336 = vmatmul.mubr.f32.gmra.mrb[0].mxu0 %v259
        %v337 = vpop.f32.mrb[0].mxu0
        %v338 = vadd.f32 %v264, %v337
        %v339 = vpop.f32.mrb[0].mxu0
        %340 = vdwg.mxu0
        %v341 = vtanh.pop %v333
        %v342 = vtanh.pop %v338
        %v343 = vmul.f32 %v341, %v256
        %v344 = vmul.f32 %v342, %v257
        %v345 = vadd.f32 %v343, %v344
        %v346 = vrot.slane %v345, 4
        %v347 = vadd.f32 %v345, %v346
        %v348 = vrot.slane %v347, 2
        %v349 = vadd.f32 %v347, %v348
        %v350 = vrot.slane %v349, 1
        %v351 = vadd.f32 %v349, %v350
        %v352 = vmul.f32 %v351, %v244
        %vm353 = vcmask 1040384
        %v354 = vsel %vm353, %v352, 0.0
        %355 = vadd.xlane.f32.xlu0 %v354
        %v356 = vpop.xlane.xlu0 %355
        %v357 = vld [vmem:[%s196 + $0x8] sm:$0xff]
        %v358 = vld [vmem:[%s196 + $0x28] sm:$0xff]
        %359 = vmatprep.subr.mxu0 0.0
        %360 = vmatpush1.msra.mxu0 %v227
        %361 = vmatprep.subr.mxu0 0.0
        %362 = vmatpush1.msra.mxu0 %v228
        %363 = vmatprep.subr.mxu0 0.0
        %364 = vmatpush1.msra.mxu0 %v229
        %365 = vmatprep.subr.mxu0 0.0
        %366 = vmatpush1.msra.mxu0 %v230
        %367 = vmatprep.subr.mxu0 0.0
        %368 = vmatpush1.msra.mxu0 %v231
        %369 = vmatprep.subr.mxu0 0.0
        %370 = vmatpush1.msra.mxu0 %v232
        %371 = vmatprep.subr.mxu0 0.0
        %372 = vmatpush1.msra.mxu0 %v233
        %373 = vmatprep.subr.mxu0 0.0
        %374 = vmatpush1.msra.mxu0 %v234
        %375 = vmatprep.subr.mxu0 0.0
        %376 = vmatpush1.msra.mxu0 %v235
        %377 = vmatprep.subr.mxu0 0.0
        %378 = vmatpush1.msra.mxu0 %v236
        %379 = vmatprep.subr.mxu0 0.0
        %380 = vmatpush1.msra.mxu0 %v237
        %381 = vmatprep.subr.mxu0 0.0
        %382 = vmatpush1.msra.mxu0 %v238
        %383 = vmatprep.subr.mxu0 0.0
        %384 = vmatpush1.msra.mxu0 %v239
        %385 = vmatprep.subr.mxu0 0.0
        %386 = vmatpush1.msra.mxu0 %v240
        %387 = vmatprep.subr.mxu0 0.0
        %388 = vmatpush1.msra.mxu0 %v241
        %389 = vmatprep.subr.mxu0 0.0
        %390 = vmatpush1.msra.mxu0 %v242
        %391 = vmatprep.subr.mxu0 0.0
        %392 = vmatpush1.msra.mxu0 0.0
        %393 = vmatprep.subr.mxu0 0.0
        %394 = vmatpush1.msra.mxu0 0.0
        %395 = vmatprep.subr.mxu0 0.0
        %396 = vmatpush1.msra.mxu0 0.0
        %397 = vmatprep.subr.mxu0 0.0
        %398 = vmatpush1.msra.mxu0 0.0
        %399 = vmatprep.subr.mxu0 0.0
        %400 = vmatpush1.msra.mxu0 0.0
        %401 = vmatprep.subr.mxu0 0.0
        %402 = vmatpush1.msra.mxu0 0.0
        %403 = vmatprep.subr.mxu0 0.0
        %404 = vmatpush1.msra.mxu0 0.0
        %405 = vmatprep.subr.mxu0 0.0
        %406 = vmatpush1.msra.mxu0 0.0
        %407 = vmatprep.subr.mxu0 0.0
        %408 = vmatpush1.msra.mxu0 0.0
        %409 = vmatprep.subr.mxu0 0.0
        %410 = vmatpush1.msra.mxu0 0.0
        %411 = vmatprep.subr.mxu0 0.0
        %412 = vmatpush1.msra.mxu0 0.0
        %413 = vmatprep.subr.mxu0 0.0
        %414 = vmatpush1.msra.mxu0 0.0
        %415 = vmatprep.subr.mxu0 0.0
        %416 = vmatpush1.msra.mxu0 0.0
        %417 = vmatprep.subr.mxu0 0.0
        %418 = vmatpush1.msra.mxu0 0.0
        %419 = vmatprep.subr.mxu0 0.0
        %420 = vmatpush1.msra.mxu0 0.0
        %421 = vmatprep.subr.mxu0 0.0
        %422 = vmatpush1.msra.mxu0 0.0
        %423 = vmatprep.mubr.f32.mxu0 0.0
        %424 = vmatmul.mubr.f32.gmra.mrb[0].mxu0 %v357
        %v425 = vpop.f32.mrb[0].mxu0
        %v426 = vadd.f32 %v264, %v425
        %v427 = vpop.f32.mrb[0].mxu0
        %428 = vmatprep.mubr.f32.mxu0 0.0
        %429 = vmatmul.mubr.f32.gmra.mrb[0].mxu0 %v358
        %v430 = vpop.f32.mrb[0].mxu0
        %v431 = vadd.f32 %v264, %v430
        %v432 = vpop.f32.mrb[0].mxu0
        %433 = vdwg.mxu0
        %v434 = vtanh.pop %v426
        %v435 = vtanh.pop %v431
        %v436 = vmul.f32 %v434, %v256
        %v437 = vmul.f32 %v435, %v257
        %v438 = vadd.f32 %v436, %v437
        %v439 = vrot.slane %v438, 4
        %v440 = vadd.f32 %v438, %v439
        %v441 = vrot.slane %v440, 2
        %v442 = vadd.f32 %v440, %v441
        %v443 = vrot.slane %v442, 1
        %v444 = vadd.f32 %v442, %v443
        %v445 = vmul.f32 %v444, %v244
        %v446 = vsel %vm353, %v445, 0.0
        %447 = vadd.xlane.f32.xlu0 %v446
        %v448 = vpop.xlane.xlu0 %447
        %v449 = vld [vmem:[%s196 + $0x10] sm:$0xff]
        %v450 = vld [vmem:[%s196 + $0x30] sm:$0xff]
        %451 = vmatprep.subr.mxu0 0.0
        %452 = vmatpush1.msra.mxu0 %v227
        %453 = vmatprep.subr.mxu0 0.0
        %454 = vmatpush1.msra.mxu0 %v228
        %455 = vmatprep.subr.mxu0 0.0
        %456 = vmatpush1.msra.mxu0 %v229
        %457 = vmatprep.subr.mxu0 0.0
        %458 = vmatpush1.msra.mxu0 %v230
        %459 = vmatprep.subr.mxu0 0.0
        %460 = vmatpush1.msra.mxu0 %v231
        %461 = vmatprep.subr.mxu0 0.0
        %462 = vmatpush1.msra.mxu0 %v232
        %463 = vmatprep.subr.mxu0 0.0
        %464 = vmatpush1.msra.mxu0 %v233
        %465 = vmatprep.subr.mxu0 0.0
        %466 = vmatpush1.msra.mxu0 %v234
        %467 = vmatprep.subr.mxu0 0.0
        %468 = vmatpush1.msra.mxu0 %v235
        %469 = vmatprep.subr.mxu0 0.0
        %470 = vmatpush1.msra.mxu0 %v236
        %471 = vmatprep.subr.mxu0 0.0
        %472 = vmatpush1.msra.mxu0 %v237
        %473 = vmatprep.subr.mxu0 0.0
        %474 = vmatpush1.msra.mxu0 %v238
        %475 = vmatprep.subr.mxu0 0.0
        %476 = vmatpush1.msra.mxu0 %v239
        %477 = vmatprep.subr.mxu0 0.0
        %478 = vmatpush1.msra.mxu0 %v240
        %479 = vmatprep.subr.mxu0 0.0
        %480 = vmatpush1.msra.mxu0 %v241
        %481 = vmatprep.subr.mxu0 0.0
        %482 = vmatpush1.msra.mxu0 %v242
        %483 = vmatprep.subr.mxu0 0.0
        %484 = vmatpush1.msra.mxu0 0.0
        %485 = vmatprep.subr.mxu0 0.0
        %486 = vmatpush1.msra.mxu0 0.0
        %487 = vmatprep.subr.mxu0 0.0
        %488 = vmatpush1.msra.mxu0 0.0
        %489 = vmatprep.subr.mxu0 0.0
        %490 = vmatpush1.msra.mxu0 0.0
        %491 = vmatprep.subr.mxu0 0.0
        %492 = vmatpush1.msra.mxu0 0.0
        %493 = vmatprep.subr.mxu0 0.0
        %494 = vmatpush1.msra.mxu0 0.0
        %495 = vmatprep.subr.mxu0 0.0
        %496 = vmatpush1.msra.mxu0 0.0
        %497 = vmatprep.subr.mxu0 0.0
        %498 = vmatpush1.msra.mxu0 0.0
        %499 = vmatprep.subr.mxu0 0.0
        %500 = vmatpush1.msra.mxu0 0.0
        %501 = vmatprep.subr.mxu0 0.0
        %502 = vmatpush1.msra.mxu0 0.0
        %503 = vmatprep.subr.mxu0 0.0
        %504 = vmatpush1.msra.mxu0 0.0
        %505 = vmatprep.subr.mxu0 0.0
        %506 = vmatpush1.msra.mxu0 0.0
        %507 = vmatprep.subr.mxu0 0.0
        %508 = vmatpush1.msra.mxu0 0.0
        %509 = vmatprep.subr.mxu0 0.0
        %510 = vmatpush1.msra.mxu0 0.0
        %511 = vmatprep.subr.mxu0 0.0
        %512 = vmatpush1.msra.mxu0 0.0
        %513 = vmatprep.subr.mxu0 0.0
        %514 = vmatpush1.msra.mxu0 0.0
        %515 = vmatprep.mubr.f32.mxu0 0.0
        %516 = vmatmul.mubr.f32.gmra.mrb[0].mxu0 %v449
        %v517 = vpop.f32.mrb[0].mxu0
        %v518 = vadd.f32 %v264, %v517
        %v519 = vpop.f32.mrb[0].mxu0
        %520 = vmatprep.mubr.f32.mxu0 0.0
        %521 = vmatmul.mubr.f32.gmra.mrb[0].mxu0 %v450
        %v522 = vpop.f32.mrb[0].mxu0
        %v523 = vadd.f32 %v264, %v522
        %v524 = vpop.f32.mrb[0].mxu0
        %525 = vdwg.mxu0
        %v526 = vtanh.pop %v518
        %v527 = vtanh.pop %v523
        %v528 = vmul.f32 %v526, %v256
        %v529 = vmul.f32 %v527, %v257
        %v530 = vadd.f32 %v528, %v529
        %v531 = vrot.slane %v530, 4
        %v532 = vadd.f32 %v530, %v531
        %v533 = vrot.slane %v532, 2
        %v534 = vadd.f32 %v532, %v533
        %v535 = vrot.slane %v534, 1
        %v536 = vadd.f32 %v534, %v535
        %v537 = vmul.f32 %v536, %v244
        %v538 = vsel %vm353, %v537, 0.0
        %539 = vadd.xlane.f32.xlu0 %v538
        %v540 = vpop.xlane.xlu0 %539
        %v541 = vld [vmem:[%s196 + $0x18] sm:$0xff]
        %v542 = vld [vmem:[%s196 + $0x38] sm:$0xff]
        %543 = vmatprep.subr.mxu0 0.0
        %544 = vmatpush1.msra.mxu0 %v227
        %545 = vmatprep.subr.mxu0 0.0
        %546 = vmatpush1.msra.mxu0 %v228
        %547 = vmatprep.subr.mxu0 0.0
        %548 = vmatpush1.msra.mxu0 %v229
        %549 = vmatprep.subr.mxu0 0.0
        %550 = vmatpush1.msra.mxu0 %v230
        %551 = vmatprep.subr.mxu0 0.0
        %552 = vmatpush1.msra.mxu0 %v231
        %553 = vmatprep.subr.mxu0 0.0
        %554 = vmatpush1.msra.mxu0 %v232
        %555 = vmatprep.subr.mxu0 0.0
        %556 = vmatpush1.msra.mxu0 %v233
        %557 = vmatprep.subr.mxu0 0.0
        %558 = vmatpush1.msra.mxu0 %v234
        %559 = vmatprep.subr.mxu0 0.0
        %560 = vmatpush1.msra.mxu0 %v235
        %561 = vmatprep.subr.mxu0 0.0
        %562 = vmatpush1.msra.mxu0 %v236
        %563 = vmatprep.subr.mxu0 0.0
        %564 = vmatpush1.msra.mxu0 %v237
        %565 = vmatprep.subr.mxu0 0.0
        %566 = vmatpush1.msra.mxu0 %v238
        %567 = vmatprep.subr.mxu0 0.0
        %568 = vmatpush1.msra.mxu0 %v239
        %569 = vmatprep.subr.mxu0 0.0
        %570 = vmatpush1.msra.mxu0 %v240
        %571 = vmatprep.subr.mxu0 0.0
        %572 = vmatpush1.msra.mxu0 %v241
        %573 = vmatprep.subr.mxu0 0.0
        %574 = vmatpush1.msra.mxu0 %v242
        %575 = vmatprep.subr.mxu0 0.0
        %576 = vmatpush1.msra.mxu0 0.0
        %577 = vmatprep.subr.mxu0 0.0
        %578 = vmatpush1.msra.mxu0 0.0
        %579 = vmatprep.subr.mxu0 0.0
        %580 = vmatpush1.msra.mxu0 0.0
        %581 = vmatprep.subr.mxu0 0.0
        %582 = vmatpush1.msra.mxu0 0.0
        %583 = vmatprep.subr.mxu0 0.0
        %584 = vmatpush1.msra.mxu0 0.0
        %585 = vmatprep.subr.mxu0 0.0
        %586 = vmatpush1.msra.mxu0 0.0
        %587 = vmatprep.subr.mxu0 0.0
        %588 = vmatpush1.msra.mxu0 0.0
        %589 = vmatprep.subr.mxu0 0.0
        %590 = vmatpush1.msra.mxu0 0.0
        %591 = vmatprep.subr.mxu0 0.0
        %592 = vmatpush1.msra.mxu0 0.0
        %593 = vmatprep.subr.mxu0 0.0
        %594 = vmatpush1.msra.mxu0 0.0
        %595 = vmatprep.subr.mxu0 0.0
        %596 = vmatpush1.msra.mxu0 0.0
        %597 = vmatprep.subr.mxu0 0.0
        %598 = vmatpush1.msra.mxu0 0.0
        %599 = vmatprep.subr.mxu0 0.0
        %600 = vmatpush1.msra.mxu0 0.0
        %601 = vmatprep.subr.mxu0 0.0
        %602 = vmatpush1.msra.mxu0 0.0
        %603 = vmatprep.subr.mxu0 0.0
        %604 = vmatpush1.msra.mxu0 0.0
        %605 = vmatprep.subr.mxu0 0.0
        %606 = vmatpush1.msra.mxu0 0.0
        %607 = vmatprep.mubr.f32.mxu0 0.0
        %608 = vmatmul.mubr.f32.gmra.mrb[0].mxu0 %v541
        %v609 = vpop.f32.mrb[0].mxu0
        %v610 = vadd.f32 %v264, %v609
        %v611 = vpop.f32.mrb[0].mxu0
        %612 = vmatprep.mubr.f32.mxu0 0.0
        %613 = vmatmul.mubr.f32.gmra.mrb[0].mxu0 %v542
        %v614 = vpop.f32.mrb[0].mxu0
        %v615 = vadd.f32 %v264, %v614
        %v616 = vpop.f32.mrb[0].mxu0
        %617 = vdwg.mxu0
        %v618 = vtanh.pop %v610
        %v619 = vtanh.pop %v615
        %v620 = vmul.f32 %v618, %v256
        %v621 = vmul.f32 %v619, %v257
        %v622 = vadd.f32 %v620, %v621
        %v623 = vrot.slane %v622, 4
        %v624 = vadd.f32 %v622, %v623
        %v625 = vrot.slane %v624, 2
        %v626 = vadd.f32 %v624, %v625
        %v627 = vrot.slane %v626, 1
        %v628 = vadd.f32 %v626, %v627
        %v629 = vmul.f32 %v628, %v244
        %v630 = vsel %vm353, %v629, 0.0
        %631 = vadd.xlane.f32.xlu0 %v630
        %v632 = vpop.xlane.xlu0 %631
        %v633 = vld [vmem:[#allocation2] sm:$0x1]
        %vm634 = vcmask 7168
        %v635 = vsel %vm634, %v356, %v448
        %vm636 = vcmask 15360
        %v637 = vsel %vm636, %v635, %v540
        %vm638 = vcmask 23552
        %v639 = vsel %vm638, %v637, %v632
        %v640 = vadd.f32 %v633, %v639
        %vm641 = vcmask 24576
        %642 = vst.msk [vmem:[#allocation2] sm:$0x1] %vm641, %v640
        %p643 = scmp.eq.s32.totalorder %s20, 4
        // Predicated region
        $region49: #{tpu_custom_call.1} parent=35 // pred_check
          %p644 = pneg %p643
        $region50: #{tpu_custom_call.1} parent=35 // pred_check_branch
          %646 = sbr.rel (%p644) target = $region52
        $region51: #{tpu_custom_call.1} parent=35 // pred_region
          %v647 = vld [vmem:[#allocation2] sm:$0x1]
          %v648 = vmul.f32 %v647, 0.013888889
          %v649 = vsel %vm641, %v648, -inf
          %650 = vmax.xlane.f32.xlu0 %v649
          %v651 = vpop.xlane.xlu0 %650
          %v652 = vsub.f32 %v648, %v651
          %v653 = vmul.f32 %v652, 1.442695
          %v654 = vpow.pop %v653
          %v655 = vsel %vm641, %v654, 0.0
          %656 = vadd.xlane.f32.xlu0 %v655
          %v657 = vpop.xlane.xlu0 %656
          %v658 = vrcp.pop %v657
          %v659 = vmul.f32 %v654, %v658
          %660 = vst.msk [vmem:[#allocation8] sm:$0x1] %vm641, %v659
        $region52: #{tpu_custom_call.1} parent=35 // pred_fallthru
          _
        // Predicated region
        $region53: #{tpu_custom_call.1} parent=35 // pred_check
          %p661 = pneg %p122
        $region54: #{tpu_custom_call.1} parent=35 // pred_check_branch
          %663 = sbr.rel (%p661) target = $region56
        $region55: #{tpu_custom_call.1} parent=35 // pred_region
          %s665 = ssub.s32 16, 16
          %666 = vsyncadd [#allocation5], %s665
          %s668 = sshll.u32 [#allocation8], 4
          %s669 = int_to_ptr.vmem [resolvable:$true] %s668
          %671 = dma.vmem_to_hbm [thread:$0]  %s669, 16, %s4, [#allocation5]
        $region56: #{tpu_custom_call.1} parent=35 // pred_fallthru
          _
        // Predicated region
        $region57: #{tpu_custom_call.1} parent=35 // pred_check
          %p672 = pneg %p122
        $region58: #{tpu_custom_call.1} parent=35 // pred_check_branch
          %674 = sbr.rel (%p672) target = $region60
        $region59: #{tpu_custom_call.1} parent=35 // pred_region
          %675 = dma.done [#allocation5], 16
        $region60: #{tpu_custom_call.1} parent=35 // pred_fallthru
          _
      $region36: #{tpu_custom_call.1} parent=5 // pred_fallthru
        _
      %p676 = scmp.le.s32.totalorder 2, %s15
      // Predicated region
      $region61: #{tpu_custom_call.1} parent=5 // pred_check
        %p677 = pneg %p676
      $region62: #{tpu_custom_call.1} parent=5 // pred_check_branch
        %679 = sbr.rel (%p677) target = $region64
      $region63: #{tpu_custom_call.1} parent=5 // pred_region
        %s680 = ssub.s32 %s15, 2
      $region64: #{tpu_custom_call.1} parent=5 // pred_fallthru
        _
    $region6: #{tpu_custom_call.1} parent=1 // loop_footer
      %s19 = sadd.s32 1, %s15
    $region7: #{tpu_custom_call.1} parent=1 // loop_footer_branch
      %14 = sbr.rel target = $region3
    $region8: #{tpu_custom_call.1} parent=1 // loop_exit
      _
    %681 = vsyncpa [#allocation4], 1
    %s682 = scalar_lea.sflag [#allocation4], 1
    %683 = vsyncpa %s682, 1
    %684 = vsyncpa [#allocation7], 1
    %685 = vsyncpa [#allocation5], 1
    %s686 = scalar_lea.sflag [#allocation5], 1
    %687 = vsyncpa %s686, 1

</llo_original>
